<compile_context>
chip_gen: v7x
topology: tpu7x:2x2x1
jax: 0.10.0
libtpu: 0.0.40
codegen_flags: <defaults>
</compile_context>

<pallas_src>
import functools

import jax
import jax.numpy as jnp
from jax.experimental import pallas as pl
from jax.experimental.pallas import tpu as pltpu


def _fused_dila_cnn_kernel(x_ref, w1_ref, b1_ref, w2_ref, b2_ref, o_ref, *,
                           seq_len, dila, block_batch):
    """Fused (dilated conv1d k=3 + ReLU) x2 for a (BT, L, C) batch tile.

    x_ref : (BT, L, C)   bf16 input block (unpadded)
    w1_ref: (3*C, C)     bf16 im2col weights, layer 1 (taps stacked along K)
    b1_ref: (1, C)       f32 bias, layer 1
    w2_ref: (3*C, C)     bf16 im2col weights, layer 2
    b2_ref: (1, C)       f32 bias, layer 2
    o_ref : (BT, L, C)   bf16 output block
    """
    c = x_ref.shape[-1]
    m = block_batch * seq_len

    def conv_relu(x_f32, w_ref, b_ref):
        # Zero halo of `dila` rows per sequence (padding == dilation keeps L).
        zpad = jnp.zeros((block_batch, dila, c), jnp.float32)
        xp = jnp.concatenate([zpad, x_f32, zpad], axis=1)            # (BT, L+2d, C)
        # im2col: stack the 3 dilated taps along the contraction dim -> K = 3C.
        cols = jnp.concatenate(
            [xp[:, k * dila:k * dila + seq_len, :] for k in range(3)],
            axis=-1)                                                 # (BT, L, 3C)
        # Fold batch into M so the whole tile is a single MXU matmul.
        cols2d = cols.reshape(m, 3 * c).astype(w_ref.dtype)          # bf16 operand
        acc = jnp.dot(cols2d, w_ref[...],
                      preferred_element_type=jnp.float32)            # (M, C) f32
        acc = jnp.maximum(acc + b_ref[...], 0.0)                     # bias + ReLU
        return acc.reshape(block_batch, seq_len, c)

    x = x_ref[...].astype(jnp.float32)                 # (BT, L, C)
    h = conv_relu(x, w1_ref, b1_ref)                   # layer 1 (VMEM-resident)
    y = conv_relu(h, w2_ref, b2_ref)                   # layer 2
    # TODO(synk): nn.Dropout(p=0.15) is identity in eval mode; training-mode
    # dropout (pltpu.prng_random_bits mask + 1/(1-p) scale) is not applied here.
    o_ref[...] = y.astype(o_ref.dtype)


def _pick_tiling(n, seq_len, *, target_m=512, min_m=128):
    """Pick batch tile BT so BT*L ~ target_m, preferring >= 2 grid steps."""
    bt = max(1, min(n, target_m // max(seq_len, 1)))
    grid = -(-n // bt)                     # cdiv
    if grid == 1 and n > 1:
        bt2 = -(-n // 2)
        if bt2 * seq_len >= min_m:         # only split if M stays >= 128
            bt, grid = bt2, 2
    return bt, grid, bt * grid             # (BT, grid steps, padded N)


@functools.partial(jax.jit, static_argnames=("dila",))
def dila_cnn_forward(x_ncl, params, dila):
    """Full DilaCNN forward (eval mode). x_ncl: (N, C, L) like PyTorch Conv1d."""
    compute_dtype = jnp.bfloat16
    n, c, seq_len = x_ncl.shape
    # Cast + transpose fuse under jit into one read-f32 / write-bf16 HBM pass.
    x_nlc = jnp.transpose(x_ncl.astype(compute_dtype), (0, 2, 1))    # (N, L, C)

    bt, grid_n, n_pad = _pick_tiling(n, seq_len)
    if n_pad != n:
        x_nlc = jnp.pad(x_nlc, ((0, n_pad - n), (0, 0), (0, 0)))

    def im2col_weight(w):
        # Conv1d weight (C_out, C_in, 3) -> (3, C_in, C_out) -> (3*C_in, C_out)
        return jnp.transpose(w, (2, 1, 0)).reshape(3 * c, c).astype(compute_dtype)

    w1 = im2col_weight(params["w1"])
    w2 = im2col_weight(params["w2"])
    b1 = params["b1"].reshape(1, c).astype(jnp.float32)
    b2 = params["b2"].reshape(1, c).astype(jnp.float32)

    kernel = functools.partial(_fused_dila_cnn_kernel, seq_len=seq_len,
                               dila=dila, block_batch=bt)
    cost = pl.CostEstimate(
        flops=4 * n_pad * seq_len * (3 * c) * c,             # 2 layers x 2*M*K*N
        transcendentals=0,
        bytes_accessed=(n_pad * seq_len * c * 2 * 2          # bf16 in + bf16 out
                        + 2 * (3 * c) * c * 2                # bf16 weights
                        + 2 * c * 4),                        # f32 biases
    )
    out_nlc = pl.pallas_call(
        kernel,
        out_shape=jax.ShapeDtypeStruct((n_pad, seq_len, c), compute_dtype),
        grid_spec=pltpu.PrefetchScalarGridSpec(
            num_scalar_prefetch=0,
            grid=(grid_n,),
            in_specs=[
                pl.BlockSpec((bt, seq_len, c), lambda b: (b, 0, 0)),
                pl.BlockSpec((3 * c, c), lambda b: (0, 0)),   # constant index map
                pl.BlockSpec((1, c), lambda b: (0, 0)),
                pl.BlockSpec((3 * c, c), lambda b: (0, 0)),
                pl.BlockSpec((1, c), lambda b: (0, 0)),
            ],
            out_specs=pl.BlockSpec((bt, seq_len, c), lambda b: (b, 0, 0)),
        ),
        compiler_params=pltpu.CompilerParams(
            dimension_semantics=("parallel",),
        ),
        cost_estimate=cost,
    )(x_nlc, w1, b1, w2, b2)
    out_nlc = out_nlc[:n]
    return jnp.transpose(out_nlc, (0, 2, 1))                  # (N, C, L) bf16


def _reference_forward(x_ncl, params, dila, *, compute_dtype=jnp.bfloat16):
    """Pure-jnp reference with matching dtype handling (bf16 operands, f32 acc)."""
    def conv(x_nlc_f32, w, b):
        _, seq_len, c_in = x_nlc_f32.shape
        xp = jnp.pad(x_nlc_f32, ((0, 0), (dila, dila), (0, 0)))
        cols = jnp.concatenate(
            [xp[:, k * dila:k * dila + seq_len, :] for k in range(3)], axis=-1
        ).astype(compute_dtype)                                      # (N, L, 3C)
        w_cat = jnp.transpose(w, (2, 1, 0)).reshape(3 * c_in, -1).astype(compute_dtype)
        acc = jnp.einsum("nlk,ko->nlo", cols, w_cat,
                         preferred_element_type=jnp.float32)
        acc = acc + b[None, None, :].astype(jnp.float32)
        return jnp.maximum(acc, 0.0)

    x_nlc = jnp.transpose(x_ncl, (0, 2, 1)).astype(compute_dtype).astype(jnp.float32)
    h = conv(x_nlc, params["w1"], params["b1"])
    y = conv(h, params["w2"], params["b2"])
    return jnp.transpose(y, (0, 2, 1))                               # (N, C, L) f32


if __name__ == "__main__":
    # Small, TPU-friendly sizes: filterSize=128 channels, seq len 16, dila=2.
    filter_size = 128
    dila = 2
    batch = 2
    seq_len = 16

    key = jax.random.PRNGKey(0)
    k_x, k_w1, k_b1, k_w2, k_b2 = jax.random.split(key, 5)

    # Conv1d param shapes: weight (C_out, C_in, 3), bias (C_out,)
    fan_in = filter_size * 3
    bound = 1.0 / (fan_in ** 0.5)
    params = {
        "w1": jax.random.uniform(k_w1, (filter_size, filter_size, 3),
                                 jnp.float32, -bound, bound),
        "b1": jax.random.uniform(k_b1, (filter_size,), jnp.float32, -bound, bound),
        "w2": jax.random.uniform(k_w2, (filter_size, filter_size, 3),
                                 jnp.float32, -bound, bound),
        "b2": jax.random.uniform(k_b2, (filter_size,), jnp.float32, -bound, bound),
    }

    x = jax.random.normal(k_x, (batch, filter_size, seq_len), jnp.float32)

    out = dila_cnn_forward(x, params, dila)
    out = jax.block_until_ready(out)

    ref = _reference_forward(x, params, dila)
    assert out.shape == (batch, filter_size, seq_len)
    assert out.dtype == jnp.bfloat16
    out_f32 = out.astype(jnp.float32)
    err = float(jnp.max(jnp.abs(out_f32 - ref)))
    assert jnp.allclose(out_f32, ref, atol=3e-2, rtol=3e-2), err

    print("KERNEL_OK")
</pallas_src>

<mosaic_0001>
module attributes {stable_mosaic.version = 11 : i64} {
  func.func @_fused_dila_cnn_kernel(%arg0: i32, %arg1: memref<2x16x128xbf16, #tpu.memory_space<vmem>>, %arg2: memref<384x128xbf16, #tpu.memory_space<vmem>>, %arg3: memref<1x128xf32, #tpu.memory_space<vmem>>, %arg4: memref<384x128xbf16, #tpu.memory_space<vmem>>, %arg5: memref<1x128xf32, #tpu.memory_space<vmem>>, %arg6: memref<2x16x128xbf16, #tpu.memory_space<vmem>>) attributes {dimension_semantics = [#tpu.dimension_semantics<parallel>], iteration_bounds = array<i64: 1>, scalar_prefetch = 0 : i64, scratch_operands = 0 : i64, tpu.core_type = #tpu.core_type<tc>, window_params = [{transform_indices = @transform_0, window_bounds = array<i64: 2, 16, 128>}, {pipeline_mode = #tpu.pipeline_mode<synchronous>, transform_indices = @transform_1, window_bounds = array<i64: 384, 128>}, {pipeline_mode = #tpu.pipeline_mode<synchronous>, transform_indices = @transform_2, window_bounds = array<i64: 1, 128>}, {pipeline_mode = #tpu.pipeline_mode<synchronous>, transform_indices = @transform_3, window_bounds = array<i64: 384, 128>}, {pipeline_mode = #tpu.pipeline_mode<synchronous>, transform_indices = @transform_4, window_bounds = array<i64: 1, 128>}, {transform_indices = @transform_5, window_bounds = array<i64: 2, 16, 128>}]} {
    %c0 = arith.constant 0 : index
    %c0_0 = arith.constant 0 : index
    %c0_1 = arith.constant 0 : index
    %0 = vector.load %arg1[%c0, %c0_0, %c0_1] : memref<2x16x128xbf16, #tpu.memory_space<vmem>>, vector<2x16x128xbf16>
    %1 = arith.extf %0 : vector<2x16x128xbf16> to vector<2x16x128xf32>
    %cst = arith.constant 0.000000e+00 : f32
    %2 = vector.broadcast %cst : f32 to vector<2x2x128xf32>
    %3 = tpu.concatenate %2, %1, %2 in 1 : vector<2x2x128xf32>, vector<2x16x128xf32>, vector<2x2x128xf32> -> vector<2x20x128xf32>
    %4 = vector.extract_strided_slice %3 {offsets = [0, 0, 0], sizes = [2, 16, 128], strides = [1, 1, 1]} : vector<2x20x128xf32> to vector<2x16x128xf32>
    %5 = vector.extract_strided_slice %3 {offsets = [0, 2, 0], sizes = [2, 16, 128], strides = [1, 1, 1]} : vector<2x20x128xf32> to vector<2x16x128xf32>
    %6 = vector.extract_strided_slice %3 {offsets = [0, 4, 0], sizes = [2, 16, 128], strides = [1, 1, 1]} : vector<2x20x128xf32> to vector<2x16x128xf32>
    %7 = tpu.concatenate %4, %5, %6 in 2 : vector<2x16x128xf32>, vector<2x16x128xf32>, vector<2x16x128xf32> -> vector<2x16x384xf32>
    %8 = vector.shape_cast %7 : vector<2x16x384xf32> to vector<32x384xf32>
    %9 = arith.truncf %8 : vector<32x384xf32> to vector<32x384xbf16>
    %c0_2 = arith.constant 0 : index
    %c0_3 = arith.constant 0 : index
    %10 = vector.load %arg2[%c0_2, %c0_3] : memref<384x128xbf16, #tpu.memory_space<vmem>>, vector<384x128xbf16>
    %cst_4 = arith.constant dense<0.000000e+00> : vector<32x128xf32>
    %11 = tpu.matmul %9, %10, %cst_4 {dimension_numbers = #tpu.dot_dimension_numbers<[1], [0], [0], [1], [0, 0, 1, 1], [], []>} : vector<32x384xbf16>, vector<384x128xbf16>, vector<32x128xf32> -> vector<32x128xf32>
    %c0_5 = arith.constant 0 : index
    %c0_6 = arith.constant 0 : index
    %12 = vector.load %arg3[%c0_5, %c0_6] : memref<1x128xf32, #tpu.memory_space<vmem>>, vector<1x128xf32>
    %13 = vector.broadcast %12 : vector<1x128xf32> to vector<32x128xf32>
    %14 = arith.addf %11, %13 : vector<32x128xf32>
    %cst_7 = arith.constant 0.000000e+00 : f32
    %15 = vector.broadcast %cst_7 : f32 to vector<32x128xf32>
    %16 = arith.maximumf %14, %15 : vector<32x128xf32>
    %17 = vector.shape_cast %16 : vector<32x128xf32> to vector<2x16x128xf32>
    %cst_8 = arith.constant 0.000000e+00 : f32
    %18 = vector.broadcast %cst_8 : f32 to vector<2x2x128xf32>
    %19 = tpu.concatenate %18, %17, %18 in 1 : vector<2x2x128xf32>, vector<2x16x128xf32>, vector<2x2x128xf32> -> vector<2x20x128xf32>
    %20 = vector.extract_strided_slice %19 {offsets = [0, 0, 0], sizes = [2, 16, 128], strides = [1, 1, 1]} : vector<2x20x128xf32> to vector<2x16x128xf32>
    %21 = vector.extract_strided_slice %19 {offsets = [0, 2, 0], sizes = [2, 16, 128], strides = [1, 1, 1]} : vector<2x20x128xf32> to vector<2x16x128xf32>
    %22 = vector.extract_strided_slice %19 {offsets = [0, 4, 0], sizes = [2, 16, 128], strides = [1, 1, 1]} : vector<2x20x128xf32> to vector<2x16x128xf32>
    %23 = tpu.concatenate %20, %21, %22 in 2 : vector<2x16x128xf32>, vector<2x16x128xf32>, vector<2x16x128xf32> -> vector<2x16x384xf32>
    %24 = vector.shape_cast %23 : vector<2x16x384xf32> to vector<32x384xf32>
    %25 = arith.truncf %24 : vector<32x384xf32> to vector<32x384xbf16>
    %c0_9 = arith.constant 0 : index
    %c0_10 = arith.constant 0 : index
    %26 = vector.load %arg4[%c0_9, %c0_10] : memref<384x128xbf16, #tpu.memory_space<vmem>>, vector<384x128xbf16>
    %cst_11 = arith.constant dense<0.000000e+00> : vector<32x128xf32>
    %27 = tpu.matmul %25, %26, %cst_11 {dimension_numbers = #tpu.dot_dimension_numbers<[1], [0], [0], [1], [0, 0, 1, 1], [], []>} : vector<32x384xbf16>, vector<384x128xbf16>, vector<32x128xf32> -> vector<32x128xf32>
    %c0_12 = arith.constant 0 : index
    %c0_13 = arith.constant 0 : index
    %28 = vector.load %arg5[%c0_12, %c0_13] : memref<1x128xf32, #tpu.memory_space<vmem>>, vector<1x128xf32>
    %29 = vector.broadcast %28 : vector<1x128xf32> to vector<32x128xf32>
    %30 = arith.addf %27, %29 : vector<32x128xf32>
    %cst_14 = arith.constant 0.000000e+00 : f32
    %31 = vector.broadcast %cst_14 : f32 to vector<32x128xf32>
    %32 = arith.maximumf %30, %31 : vector<32x128xf32>
    %33 = vector.shape_cast %32 : vector<32x128xf32> to vector<2x16x128xf32>
    %34 = arith.truncf %33 : vector<2x16x128xf32> to vector<2x16x128xbf16>
    %c0_15 = arith.constant 0 : index
    %c0_16 = arith.constant 0 : index
    %c0_17 = arith.constant 0 : index
    %35 = vector.load %arg6[%c0_15, %c0_16, %c0_17] : memref<2x16x128xbf16, #tpu.memory_space<vmem>>, vector<2x16x128xbf16>
    tpu.vector_store %arg6[%c0_15, %c0_16, %c0_17], %34 {strides = array<i32>} : memref<2x16x128xbf16, #tpu.memory_space<vmem>>, vector<2x16x128xbf16>,
    return
  }
  func.func @transform_0(%arg0: i32) -> (i32, i32, i32) {
    %c0_i32 = arith.constant 0 : i32
    %c0_i32_0 = arith.constant 0 : i32
    %c0_i32_1 = arith.constant 0 : i32
    return %arg0, %c0_i32, %c0_i32_0 : i32, i32, i32
  }
  func.func @transform_1(%arg0: i32) -> (i32, i32) {
    %c0_i32 = arith.constant 0 : i32
    %c0_i32_0 = arith.constant 0 : i32
    %c0_i32_1 = arith.constant 0 : i32
    return %c0_i32, %c0_i32_0 : i32, i32
  }
  func.func @transform_2(%arg0: i32) -> (i32, i32) {
    %c0_i32 = arith.constant 0 : i32
    %c0_i32_0 = arith.constant 0 : i32
    %c0_i32_1 = arith.constant 0 : i32
    return %c0_i32, %c0_i32_0 : i32, i32
  }
  func.func @transform_3(%arg0: i32) -> (i32, i32) {
    %c0_i32 = arith.constant 0 : i32
    %c0_i32_0 = arith.constant 0 : i32
    %c0_i32_1 = arith.constant 0 : i32
    return %c0_i32, %c0_i32_0 : i32, i32
  }
  func.func @transform_4(%arg0: i32) -> (i32, i32) {
    %c0_i32 = arith.constant 0 : i32
    %c0_i32_0 = arith.constant 0 : i32
    %c0_i32_1 = arith.constant 0 : i32
    return %c0_i32, %c0_i32_0 : i32, i32
  }
  func.func @transform_5(%arg0: i32) -> (i32, i32, i32) {
    %c0_i32 = arith.constant 0 : i32
    %c0_i32_0 = arith.constant 0 : i32
    %c0_i32_1 = arith.constant 0 : i32
    return %arg0, %c0_i32, %c0_i32_0 : i32, i32, i32
  }
}

</mosaic_0001>

<llo_original>
// kernel: dila_cnn_forward.1
$region0: #{dila_cnn_forward.1}
  #allocation0 [shape = 'u32[]', space=smem, size = 0x4, offset = 0x4, fixed_abs, tag = 'smem constant byte address 0x4 - core index']
  #allocation1 [shape = 'u32[144,128]{1,0:T(1,128)}', space=vmem, size = 0x12000, scoped, tag = 'internal scratch']
  %s0 = inlined_call_operand.vmem [shape: bf16[2,16,128], index: 0, kind: input, shape index: {}]
  %s1 = inlined_call_operand.vmem [shape: bf16[384,128], index: 1, kind: input, shape index: {}]
  %s2 = inlined_call_operand.vmem [shape: f32[1,128], index: 2, kind: input, shape index: {}]
  %s3 = inlined_call_operand.vmem [shape: bf16[384,128], index: 3, kind: input, shape index: {}]
  %s4 = inlined_call_operand.vmem [shape: f32[1,128], index: 4, kind: input, shape index: {}]
  %s5 = inlined_call_operand.hbm [shape: bf16[2,16,128], index: 5, kind: output, shape index: {}]
  %s6 = sld [smem:[#allocation0]]
  $region30: #{dila_cnn_forward.1} parent=0
    _
  %s8 = ssub.s32 1, %s6
  %s9 = scalar_select 0, %s8, %s6
  $region1: #{dila_cnn_forward.1} parent=0
    #allocation2 [shape = 'u8[8192]{0}', space=vmem, size = 0x2000, scoped, tag = 'output window, operand 0, single buffered']
    #allocation3 [shape = 's32[1]{0}', space=sflag, size = 0x4, scoped, tag = 'scoped memory for dila_cnn_forward.1']
    %10 = vsyncpa [#allocation3], 0
    // Predicated region
    $region2: #{dila_cnn_forward.1} parent=1 // pred_check
      _
    $region3: #{dila_cnn_forward.1} parent=1 // pred_check_branch
      %12 = sbr.rel (0) target = $region5
    $region4: #{dila_cnn_forward.1} parent=1 // pred_region
      _
    $region5: #{dila_cnn_forward.1} parent=1 // pred_fallthru
      _
    // Predicated region
    $region6: #{dila_cnn_forward.1} parent=1 // pred_check
      _
    $region7: #{dila_cnn_forward.1} parent=1 // pred_check_branch
      %14 = sbr.rel (0) target = $region9
    $region8: #{dila_cnn_forward.1} parent=1 // pred_region
      _
    $region9: #{dila_cnn_forward.1} parent=1 // pred_fallthru
      _
    // Predicated region
    $region10: #{dila_cnn_forward.1} parent=1 // pred_check
      _
    $region11: #{dila_cnn_forward.1} parent=1 // pred_check_branch
      %16 = sbr.rel (0) target = $region13
    $region12: #{dila_cnn_forward.1} parent=1 // pred_region
      _
    $region13: #{dila_cnn_forward.1} parent=1 // pred_fallthru
      _
    // Predicated region
    $region14: #{dila_cnn_forward.1} parent=1 // pred_check
      _
    $region15: #{dila_cnn_forward.1} parent=1 // pred_check_branch
      %18 = sbr.rel (0) target = $region17
    $region16: #{dila_cnn_forward.1} parent=1 // pred_region
      _
    $region17: #{dila_cnn_forward.1} parent=1 // pred_fallthru
      _
    // Predicated region
    $region18: #{dila_cnn_forward.1} parent=1 // pred_check
      _
    $region19: #{dila_cnn_forward.1} parent=1 // pred_check_branch
      %20 = sbr.rel (0) target = $region21
    $region20: #{dila_cnn_forward.1} parent=1 // pred_region
      _
    $region21: #{dila_cnn_forward.1} parent=1 // pred_fallthru
      _
    %v22 = vld [vmem:[%s0] sm:$0xf]
    %v23 = vld [vmem:[%s0 + $0x4] sm:$0xf]
    %v24 = vld [vmem:[%s0 + $0x8] sm:$0xf]
    %v25 = vld [vmem:[%s0 + $0xc] sm:$0xf]
    %v26 = vunpack.c.l.bf16 %v22
    %v27 = vunpack.c.l.bf16 %v23
    %v28 = vunpack.c.l.bf16 %v24
    %v29 = vunpack.c.l.bf16 %v25
    %vm34 = vcmask 1041408
    %v35 = vrot.slane %v26, 6
    %v36 = vrot.slane %v27, 6
    %v37 = vsel %vm34, %v35, %v36
    %v38 = vrot.slane %v28, 6
    %v39 = vrot.slane %v29, 6
    %v40 = vsel %vm34, %v38, %v39
    %v47 = vsel %vm34, 0.0, %v35
    %v48 = vsel %vm34, 0.0, %v38
    %v49 = vsel %vm34, %v36, 0.0
    %v50 = vsel %vm34, %v39, 0.0
    %vm55 = vcmask 1045504
    %v56 = vrot.slane %v47, 2
    %v57 = vrot.slane %v37, 2
    %v58 = vsel %vm55, %v56, %v57
    %v59 = vrot.slane %v49, 2
    %v60 = vsel %vm55, %v57, %v59
    %v61 = vrot.slane %v48, 2
    %v62 = vrot.slane %v40, 2
    %v63 = vsel %vm55, %v61, %v62
    %v64 = vrot.slane %v50, 2
    %v65 = vsel %vm55, %v62, %v64
    %vm70 = vcmask 1043456
    %v71 = vrot.slane %v47, 4
    %v72 = vrot.slane %v37, 4
    %v73 = vsel %vm70, %v71, %v72
    %v74 = vrot.slane %v49, 4
    %v75 = vsel %vm70, %v72, %v74
    %v76 = vrot.slane %v48, 4
    %v77 = vrot.slane %v40, 4
    %v78 = vsel %vm70, %v76, %v77
    %v79 = vrot.slane %v50, 4
    %v80 = vsel %vm70, %v77, %v79
    %v85 = vpack.c.bf16 %v37, %v47
    %v86 = vpack.c.bf16 %v60, %v58
    %v87 = vpack.c.bf16 %v75, %v73
    %v88 = vpack.c.bf16 %v40, %v48
    %v89 = vpack.c.bf16 %v65, %v63
    %v90 = vpack.c.bf16 %v80, %v78
    %v91 = vld [vmem:[%s1] sm:$0xf]
    %v92 = vld [vmem:[%s1 + $0x4] sm:$0xf]
    %v93 = vld [vmem:[%s1 + $0x8] sm:$0xf]
    %v94 = vld [vmem:[%s1 + $0xc] sm:$0xf]
    %v95 = vld [vmem:[%s1 + $0x10] sm:$0xf]
    %v96 = vld [vmem:[%s1 + $0x14] sm:$0xf]
    %v97 = vld [vmem:[%s1 + $0x18] sm:$0xf]
    %v98 = vld [vmem:[%s1 + $0x1c] sm:$0xf]
    %v99 = vld [vmem:[%s1 + $0x20] sm:$0xf]
    %v100 = vld [vmem:[%s1 + $0x24] sm:$0xf]
    %v101 = vld [vmem:[%s1 + $0x28] sm:$0xf]
    %v102 = vld [vmem:[%s1 + $0x2c] sm:$0xf]
    %v103 = vld [vmem:[%s1 + $0x30] sm:$0xf]
    %v104 = vld [vmem:[%s1 + $0x34] sm:$0xf]
    %v105 = vld [vmem:[%s1 + $0x38] sm:$0xf]
    %v106 = vld [vmem:[%s1 + $0x3c] sm:$0xf]
    %v107 = vld [vmem:[%s1 + $0x40] sm:$0xf]
    %v108 = vld [vmem:[%s1 + $0x44] sm:$0xf]
    %v109 = vld [vmem:[%s1 + $0x48] sm:$0xf]
    %v110 = vld [vmem:[%s1 + $0x4c] sm:$0xf]
    %v111 = vld [vmem:[%s1 + $0x50] sm:$0xf]
    %v112 = vld [vmem:[%s1 + $0x54] sm:$0xf]
    %v113 = vld [vmem:[%s1 + $0x58] sm:$0xf]
    %v114 = vld [vmem:[%s1 + $0x5c] sm:$0xf]
    %v115 = vld [vmem:[%s1 + $0x60] sm:$0xf]
    %v116 = vld [vmem:[%s1 + $0x64] sm:$0xf]
    %v117 = vld [vmem:[%s1 + $0x68] sm:$0xf]
    %v118 = vld [vmem:[%s1 + $0x6c] sm:$0xf]
    %v119 = vld [vmem:[%s1 + $0x70] sm:$0xf]
    %v120 = vld [vmem:[%s1 + $0x74] sm:$0xf]
    %v121 = vld [vmem:[%s1 + $0x78] sm:$0xf]
    %v122 = vld [vmem:[%s1 + $0x7c] sm:$0xf]
    %v123 = vld [vmem:[%s1 + $0x80] sm:$0xf]
    %v124 = vld [vmem:[%s1 + $0x84] sm:$0xf]
    %v125 = vld [vmem:[%s1 + $0x88] sm:$0xf]
    %v126 = vld [vmem:[%s1 + $0x8c] sm:$0xf]
    %v127 = vld [vmem:[%s1 + $0x90] sm:$0xf]
    %v128 = vld [vmem:[%s1 + $0x94] sm:$0xf]
    %v129 = vld [vmem:[%s1 + $0x98] sm:$0xf]
    %v130 = vld [vmem:[%s1 + $0x9c] sm:$0xf]
    %v131 = vld [vmem:[%s1 + $0xa0] sm:$0xf]
    %v132 = vld [vmem:[%s1 + $0xa4] sm:$0xf]
    %v133 = vld [vmem:[%s1 + $0xa8] sm:$0xf]
    %v134 = vld [vmem:[%s1 + $0xac] sm:$0xf]
    %v135 = vld [vmem:[%s1 + $0xb0] sm:$0xf]
    %v136 = vld [vmem:[%s1 + $0xb4] sm:$0xf]
    %v137 = vld [vmem:[%s1 + $0xb8] sm:$0xf]
    %v138 = vld [vmem:[%s1 + $0xbc] sm:$0xf]
    %v139 = vld [vmem:[%s2] sm:$0x1]
    %v141 = vlaneseq
    %v142 = vshrl.u32 %v141, 7
    %v143 = vsub.s32 0, %v142
    %v144 = vrot.slane %v139, %v143
    %v194 = vunpack.c.l.b16 %v91
    %v195 = vunpack.c.l.b16 %v92
    %v196 = vunpack.c.l.b16 %v93
    %v197 = vunpack.c.l.b16 %v94
    %v198 = vunpack.c.l.b16 %v95
    %v199 = vunpack.c.l.b16 %v96
    %v200 = vunpack.c.l.b16 %v97
    %v201 = vunpack.c.l.b16 %v98
    %v202 = vunpack.c.l.b16 %v99
    %v203 = vunpack.c.l.b16 %v100
    %v204 = vunpack.c.l.b16 %v101
    %v205 = vunpack.c.l.b16 %v102
    %v206 = vunpack.c.l.b16 %v103
    %v207 = vunpack.c.l.b16 %v104
    %v208 = vunpack.c.l.b16 %v105
    %v209 = vunpack.c.l.b16 %v106
    %v210 = vunpack.c.l.b16 %v107
    %v211 = vunpack.c.l.b16 %v108
    %v212 = vunpack.c.l.b16 %v109
    %v213 = vunpack.c.l.b16 %v110
    %v214 = vunpack.c.l.b16 %v111
    %v215 = vunpack.c.l.b16 %v112
    %v216 = vunpack.c.l.b16 %v113
    %v217 = vunpack.c.l.b16 %v114
    %v218 = vunpack.c.l.b16 %v115
    %v219 = vunpack.c.l.b16 %v116
    %v220 = vunpack.c.l.b16 %v117
    %v221 = vunpack.c.l.b16 %v118
    %v222 = vunpack.c.l.b16 %v119
    %v223 = vunpack.c.l.b16 %v120
    %v224 = vunpack.c.l.b16 %v121
    %v225 = vunpack.c.l.b16 %v122
    %v226 = vunpack.c.l.b16 %v123
    %v227 = vunpack.c.l.b16 %v124
    %v228 = vunpack.c.l.b16 %v125
    %v229 = vunpack.c.l.b16 %v126
    %v230 = vunpack.c.l.b16 %v127
    %v231 = vunpack.c.l.b16 %v128
    %v232 = vunpack.c.l.b16 %v129
    %v233 = vunpack.c.l.b16 %v130
    %v234 = vunpack.c.l.b16 %v131
    %v235 = vunpack.c.l.b16 %v132
    %v236 = vunpack.c.l.b16 %v133
    %v237 = vunpack.c.l.b16 %v134
    %v238 = vunpack.c.l.b16 %v135
    %v239 = vunpack.c.l.b16 %v136
    %v240 = vunpack.c.l.b16 %v137
    %v241 = vunpack.c.l.b16 %v138
    %v242 = vpack.c.b16 %v195, %v194
    %v243 = vpack.c.b16 %v197, %v196
    %v244 = vpack.c.b16 %v199, %v198
    %v245 = vpack.c.b16 %v201, %v200
    %v246 = vpack.c.b16 %v203, %v202
    %v247 = vpack.c.b16 %v205, %v204
    %v248 = vpack.c.b16 %v207, %v206
    %v249 = vpack.c.b16 %v209, %v208
    %v250 = vpack.c.b16 %v211, %v210
    %v251 = vpack.c.b16 %v213, %v212
    %v252 = vpack.c.b16 %v215, %v214
    %v253 = vpack.c.b16 %v217, %v216
    %v254 = vpack.c.b16 %v219, %v218
    %v255 = vpack.c.b16 %v221, %v220
    %v256 = vpack.c.b16 %v223, %v222
    %v257 = vpack.c.b16 %v225, %v224
    %v258 = vpack.c.b16 %v227, %v226
    %v259 = vpack.c.b16 %v229, %v228
    %v260 = vpack.c.b16 %v231, %v230
    %v261 = vpack.c.b16 %v233, %v232
    %v262 = vpack.c.b16 %v235, %v234
    %v263 = vpack.c.b16 %v237, %v236
    %v264 = vpack.c.b16 %v239, %v238
    %v265 = vpack.c.b16 %v241, %v240
    %290 = vmatprep.subr.bf16.mxu0 0
    %291 = vmatpush1.bf16.msra.mxu0 %v242
    %292 = vmatprep.subr.bf16.mxu0 0
    %293 = vmatpush1.bf16.msra.mxu0 %v243
    %294 = vmatprep.subr.bf16.mxu0 0
    %295 = vmatpush1.bf16.msra.mxu0 %v244
    %296 = vmatprep.subr.bf16.mxu0 0
    %297 = vmatpush1.bf16.msra.mxu0 %v245
    %298 = vmatprep.subr.bf16.mxu0 0
    %299 = vmatpush1.bf16.msra.mxu0 %v246
    %300 = vmatprep.subr.bf16.mxu0 0
    %301 = vmatpush1.bf16.msra.mxu0 %v247
    %302 = vmatprep.subr.bf16.mxu0 0
    %303 = vmatpush1.bf16.msra.mxu0 %v248
    %304 = vmatprep.subr.bf16.mxu0 0
    %305 = vmatpush1.bf16.msra.mxu0 %v249
    %306 = vmatprep.subr.bf16.mxu0 0
    %307 = vmatpush1.bf16.msra.mxu0 %v250
    %308 = vmatprep.subr.bf16.mxu0 0
    %309 = vmatpush1.bf16.msra.mxu0 %v251
    %310 = vmatprep.subr.bf16.mxu0 0
    %311 = vmatpush1.bf16.msra.mxu0 %v252
    %312 = vmatprep.subr.bf16.mxu0 0
    %313 = vmatpush1.bf16.msra.mxu0 %v253
    %314 = vmatprep.subr.bf16.mxu0 0
    %315 = vmatpush1.bf16.msra.mxu0 %v254
    %316 = vmatprep.subr.bf16.mxu0 0
    %317 = vmatpush1.bf16.msra.mxu0 %v255
    %318 = vmatprep.subr.bf16.mxu0 0
    %319 = vmatpush1.bf16.msra.mxu0 %v256
    %320 = vmatprep.subr.bf16.mxu0 0
    %321 = vmatpush1.bf16.msra.mxu0 %v257
    %322 = vmatprep.mubr.bf16.mxu0 %v86
    %323 = vmatmul.mubr.bf16.gmra.mrb[0].mxu0 %v85
    %v324 = vpop.f32.mrb[0].mxu0
    %v325 = vadd.f32 %v144, %v324
    %v326 = vpop.f32.mrb[0].mxu0
    %v327 = vpop.f32.mrb[0].mxu0
    %v328 = vadd.f32 %v144, %v327
    %v329 = vpop.f32.mrb[0].mxu0
    %330 = vmatprep.mubr.bf16.mxu0 %v89
    %331 = vmatmul.mubr.bf16.gmra.mrb[0].mxu0 %v88
    %v332 = vpop.f32.mrb[0].mxu0
    %v333 = vadd.f32 %v144, %v332
    %v334 = vpop.f32.mrb[0].mxu0
    %v335 = vpop.f32.mrb[0].mxu0
    %v336 = vadd.f32 %v144, %v335
    %v337 = vpop.f32.mrb[0].mxu0
    %338 = vdwg.mxu0
    %339 = vmatprep.subr.bf16.mxu0 0
    %340 = vmatpush1.bf16.msra.mxu0 %v258
    %341 = vmatprep.subr.bf16.mxu0 0
    %342 = vmatpush1.bf16.msra.mxu0 %v259
    %343 = vmatprep.subr.bf16.mxu0 0
    %344 = vmatpush1.bf16.msra.mxu0 %v260
    %345 = vmatprep.subr.bf16.mxu0 0
    %346 = vmatpush1.bf16.msra.mxu0 %v261
    %347 = vmatprep.subr.bf16.mxu0 0
    %348 = vmatpush1.bf16.msra.mxu0 %v262
    %349 = vmatprep.subr.bf16.mxu0 0
    %350 = vmatpush1.bf16.msra.mxu0 %v263
    %351 = vmatprep.subr.bf16.mxu0 0
    %352 = vmatpush1.bf16.msra.mxu0 %v264
    %353 = vmatprep.subr.bf16.mxu0 0
    %354 = vmatpush1.bf16.msra.mxu0 %v265
    %355 = vmatprep.subr.bf16.mxu0 0
    %356 = vmatpush1.bf16.msra.mxu0 0
    %357 = vmatprep.subr.bf16.mxu0 0
    %358 = vmatpush1.bf16.msra.mxu0 0
    %359 = vmatprep.subr.bf16.mxu0 0
    %360 = vmatpush1.bf16.msra.mxu0 0
    %361 = vmatprep.subr.bf16.mxu0 0
    %362 = vmatpush1.bf16.msra.mxu0 0
    %363 = vmatprep.subr.bf16.mxu0 0
    %364 = vmatpush1.bf16.msra.mxu0 0
    %365 = vmatprep.subr.bf16.mxu0 0
    %366 = vmatpush1.bf16.msra.mxu0 0
    %367 = vmatprep.subr.bf16.mxu0 0
    %368 = vmatpush1.bf16.msra.mxu0 0
    %369 = vmatprep.subr.bf16.mxu0 0
    %370 = vmatpush1.bf16.msra.mxu0 0
    %371 = vmatprep.mubr.bf16.mxu0 0
    %372 = vmatmul.mubr.bf16.gmra.mrb[0].mxu0 %v87
    %v373 = vpop.f32.mrb[0].mxu0
    %v374 = vadd.f32 %v325, %v373
    %v375 = vpop.f32.mrb[0].mxu0
    %v376 = vpop.f32.mrb[0].mxu0
    %v377 = vadd.f32 %v328, %v376
    %v378 = vpop.f32.mrb[0].mxu0
    %379 = vmatprep.mubr.bf16.mxu0 0
    %380 = vmatmul.mubr.bf16.gmra.mrb[0].mxu0 %v90
    %v381 = vpop.f32.mrb[0].mxu0
    %v382 = vadd.f32 %v333, %v381
    %v383 = vpop.f32.mrb[0].mxu0
    %v384 = vpop.f32.mrb[0].mxu0
    %v385 = vadd.f32 %v336, %v384
    %v386 = vpop.f32.mrb[0].mxu0
    %387 = vdwg.mxu0
    %v388 = vmax.f32 %v374, 0.0
    %v389 = vmax.f32 %v377, 0.0
    %v390 = vmax.f32 %v382, 0.0
    %v391 = vmax.f32 %v385, 0.0
    %v396 = vrot.slane %v388, 6
    %v397 = vrot.slane %v389, 6
    %v398 = vsel %vm34, %v396, %v397
    %v399 = vrot.slane %v390, 6
    %v400 = vrot.slane %v391, 6
    %v401 = vsel %vm34, %v399, %v400
    %v408 = vsel %vm34, 0.0, %v396
    %v409 = vsel %vm34, 0.0, %v399
    %v410 = vsel %vm34, %v397, 0.0
    %v411 = vsel %vm34, %v400, 0.0
    %v416 = vrot.slane %v408, 2
    %v417 = vrot.slane %v398, 2
    %v418 = vsel %vm55, %v416, %v417
    %v419 = vrot.slane %v410, 2
    %v420 = vsel %vm55, %v417, %v419
    %v421 = vrot.slane %v409, 2
    %v422 = vrot.slane %v401, 2
    %v423 = vsel %vm55, %v421, %v422
    %v424 = vrot.slane %v411, 2
    %v425 = vsel %vm55, %v422, %v424
    %v430 = vrot.slane %v408, 4
    %v431 = vrot.slane %v398, 4
    %v432 = vsel %vm70, %v430, %v431
    %v433 = vrot.slane %v410, 4
    %v434 = vsel %vm70, %v431, %v433
    %v435 = vrot.slane %v409, 4
    %v436 = vrot.slane %v401, 4
    %v437 = vsel %vm70, %v435, %v436
    %v438 = vrot.slane %v411, 4
    %v439 = vsel %vm70, %v436, %v438
    %v444 = vpack.c.bf16 %v398, %v408
    %v445 = vpack.c.bf16 %v420, %v418
    %v446 = vpack.c.bf16 %v434, %v432
    %v447 = vpack.c.bf16 %v401, %v409
    %v448 = vpack.c.bf16 %v425, %v423
    %v449 = vpack.c.bf16 %v439, %v437
    %v450 = vld [vmem:[%s3] sm:$0xf]
    %v451 = vld [vmem:[%s3 + $0x4] sm:$0xf]
    %v452 = vld [vmem:[%s3 + $0x8] sm:$0xf]
    %v453 = vld [vmem:[%s3 + $0xc] sm:$0xf]
    %v454 = vld [vmem:[%s3 + $0x10] sm:$0xf]
    %v455 = vld [vmem:[%s3 + $0x14] sm:$0xf]
    %v456 = vld [vmem:[%s3 + $0x18] sm:$0xf]
    %v457 = vld [vmem:[%s3 + $0x1c] sm:$0xf]
    %v458 = vld [vmem:[%s3 + $0x20] sm:$0xf]
    %v459 = vld [vmem:[%s3 + $0x24] sm:$0xf]
    %v460 = vld [vmem:[%s3 + $0x28] sm:$0xf]
    %v461 = vld [vmem:[%s3 + $0x2c] sm:$0xf]
    %v462 = vld [vmem:[%s3 + $0x30] sm:$0xf]
    %v463 = vld [vmem:[%s3 + $0x34] sm:$0xf]
    %v464 = vld [vmem:[%s3 + $0x38] sm:$0xf]
    %v465 = vld [vmem:[%s3 + $0x3c] sm:$0xf]
    %v466 = vld [vmem:[%s3 + $0x40] sm:$0xf]
    %v467 = vld [vmem:[%s3 + $0x44] sm:$0xf]
    %v468 = vld [vmem:[%s3 + $0x48] sm:$0xf]
    %v469 = vld [vmem:[%s3 + $0x4c] sm:$0xf]
    %v470 = vld [vmem:[%s3 + $0x50] sm:$0xf]
    %v471 = vld [vmem:[%s3 + $0x54] sm:$0xf]
    %v472 = vld [vmem:[%s3 + $0x58] sm:$0xf]
    %v473 = vld [vmem:[%s3 + $0x5c] sm:$0xf]
    %v474 = vld [vmem:[%s3 + $0x60] sm:$0xf]
    %v475 = vld [vmem:[%s3 + $0x64] sm:$0xf]
    %v476 = vld [vmem:[%s3 + $0x68] sm:$0xf]
    %v477 = vld [vmem:[%s3 + $0x6c] sm:$0xf]
    %v478 = vld [vmem:[%s3 + $0x70] sm:$0xf]
    %v479 = vld [vmem:[%s3 + $0x74] sm:$0xf]
    %v480 = vld [vmem:[%s3 + $0x78] sm:$0xf]
    %v481 = vld [vmem:[%s3 + $0x7c] sm:$0xf]
    %v482 = vld [vmem:[%s3 + $0x80] sm:$0xf]
    %v483 = vld [vmem:[%s3 + $0x84] sm:$0xf]
    %v484 = vld [vmem:[%s3 + $0x88] sm:$0xf]
    %v485 = vld [vmem:[%s3 + $0x8c] sm:$0xf]
    %v486 = vld [vmem:[%s3 + $0x90] sm:$0xf]
    %v487 = vld [vmem:[%s3 + $0x94] sm:$0xf]
    %v488 = vld [vmem:[%s3 + $0x98] sm:$0xf]
    %v489 = vld [vmem:[%s3 + $0x9c] sm:$0xf]
    %v490 = vld [vmem:[%s3 + $0xa0] sm:$0xf]
    %v491 = vld [vmem:[%s3 + $0xa4] sm:$0xf]
    %v492 = vld [vmem:[%s3 + $0xa8] sm:$0xf]
    %v493 = vld [vmem:[%s3 + $0xac] sm:$0xf]
    %v494 = vld [vmem:[%s3 + $0xb0] sm:$0xf]
    %v495 = vld [vmem:[%s3 + $0xb4] sm:$0xf]
    %v496 = vld [vmem:[%s3 + $0xb8] sm:$0xf]
    %v497 = vld [vmem:[%s3 + $0xbc] sm:$0xf]
    %v498 = vld [vmem:[%s4] sm:$0x1]
    %v500 = vlaneseq
    %v501 = vshrl.u32 %v500, 7
    %v502 = vsub.s32 0, %v501
    %v503 = vrot.slane %v498, %v502
    %v553 = vunpack.c.l.b16 %v450
    %v554 = vunpack.c.l.b16 %v451
    %v555 = vunpack.c.l.b16 %v452
    %v556 = vunpack.c.l.b16 %v453
    %v557 = vunpack.c.l.b16 %v454
    %v558 = vunpack.c.l.b16 %v455
    %v559 = vunpack.c.l.b16 %v456
    %v560 = vunpack.c.l.b16 %v457
    %v561 = vunpack.c.l.b16 %v458
    %v562 = vunpack.c.l.b16 %v459
    %v563 = vunpack.c.l.b16 %v460
    %v564 = vunpack.c.l.b16 %v461
    %v565 = vunpack.c.l.b16 %v462
    %v566 = vunpack.c.l.b16 %v463
    %v567 = vunpack.c.l.b16 %v464
    %v568 = vunpack.c.l.b16 %v465
    %v569 = vunpack.c.l.b16 %v466
    %v570 = vunpack.c.l.b16 %v467
    %v571 = vunpack.c.l.b16 %v468
    %v572 = vunpack.c.l.b16 %v469
    %v573 = vunpack.c.l.b16 %v470
    %v574 = vunpack.c.l.b16 %v471
    %v575 = vunpack.c.l.b16 %v472
    %v576 = vunpack.c.l.b16 %v473
    %v577 = vunpack.c.l.b16 %v474
    %v578 = vunpack.c.l.b16 %v475
    %v579 = vunpack.c.l.b16 %v476
    %v580 = vunpack.c.l.b16 %v477
    %v581 = vunpack.c.l.b16 %v478
    %v582 = vunpack.c.l.b16 %v479
    %v583 = vunpack.c.l.b16 %v480
    %v584 = vunpack.c.l.b16 %v481
    %v585 = vunpack.c.l.b16 %v482
    %v586 = vunpack.c.l.b16 %v483
    %v587 = vunpack.c.l.b16 %v484
    %v588 = vunpack.c.l.b16 %v485
    %v589 = vunpack.c.l.b16 %v486
    %v590 = vunpack.c.l.b16 %v487
    %v591 = vunpack.c.l.b16 %v488
    %v592 = vunpack.c.l.b16 %v489
    %v593 = vunpack.c.l.b16 %v490
    %v594 = vunpack.c.l.b16 %v491
    %v595 = vunpack.c.l.b16 %v492
    %v596 = vunpack.c.l.b16 %v493
    %v597 = vunpack.c.l.b16 %v494
    %v598 = vunpack.c.l.b16 %v495
    %v599 = vunpack.c.l.b16 %v496
    %v600 = vunpack.c.l.b16 %v497
    %v601 = vpack.c.b16 %v554, %v553
    %v602 = vpack.c.b16 %v556, %v555
    %v603 = vpack.c.b16 %v558, %v557
    %v604 = vpack.c.b16 %v560, %v559
    %v605 = vpack.c.b16 %v562, %v561
    %v606 = vpack.c.b16 %v564, %v563
    %v607 = vpack.c.b16 %v566, %v565
    %v608 = vpack.c.b16 %v568, %v567
    %v609 = vpack.c.b16 %v570, %v569
    %v610 = vpack.c.b16 %v572, %v571
    %v611 = vpack.c.b16 %v574, %v573
    %v612 = vpack.c.b16 %v576, %v575
    %v613 = vpack.c.b16 %v578, %v577
    %v614 = vpack.c.b16 %v580, %v579
    %v615 = vpack.c.b16 %v582, %v581
    %v616 = vpack.c.b16 %v584, %v583
    %v617 = vpack.c.b16 %v586, %v585
    %v618 = vpack.c.b16 %v588, %v587
    %v619 = vpack.c.b16 %v590, %v589
    %v620 = vpack.c.b16 %v592, %v591
    %v621 = vpack.c.b16 %v594, %v593
    %v622 = vpack.c.b16 %v596, %v595
    %v623 = vpack.c.b16 %v598, %v597
    %v624 = vpack.c.b16 %v600, %v599
    %649 = vmatprep.subr.bf16.mxu0 0
    %650 = vmatpush1.bf16.msra.mxu0 %v601
    %651 = vmatprep.subr.bf16.mxu0 0
    %652 = vmatpush1.bf16.msra.mxu0 %v602
    %653 = vmatprep.subr.bf16.mxu0 0
    %654 = vmatpush1.bf16.msra.mxu0 %v603
    %655 = vmatprep.subr.bf16.mxu0 0
    %656 = vmatpush1.bf16.msra.mxu0 %v604
    %657 = vmatprep.subr.bf16.mxu0 0
    %658 = vmatpush1.bf16.msra.mxu0 %v605
    %659 = vmatprep.subr.bf16.mxu0 0
    %660 = vmatpush1.bf16.msra.mxu0 %v606
    %661 = vmatprep.subr.bf16.mxu0 0
    %662 = vmatpush1.bf16.msra.mxu0 %v607
    %663 = vmatprep.subr.bf16.mxu0 0
    %664 = vmatpush1.bf16.msra.mxu0 %v608
    %665 = vmatprep.subr.bf16.mxu0 0
    %666 = vmatpush1.bf16.msra.mxu0 %v609
    %667 = vmatprep.subr.bf16.mxu0 0
    %668 = vmatpush1.bf16.msra.mxu0 %v610
    %669 = vmatprep.subr.bf16.mxu0 0
    %670 = vmatpush1.bf16.msra.mxu0 %v611
    %671 = vmatprep.subr.bf16.mxu0 0
    %672 = vmatpush1.bf16.msra.mxu0 %v612
    %673 = vmatprep.subr.bf16.mxu0 0
    %674 = vmatpush1.bf16.msra.mxu0 %v613
    %675 = vmatprep.subr.bf16.mxu0 0
    %676 = vmatpush1.bf16.msra.mxu0 %v614
    %677 = vmatprep.subr.bf16.mxu0 0
    %678 = vmatpush1.bf16.msra.mxu0 %v615
    %679 = vmatprep.subr.bf16.mxu0 0
    %680 = vmatpush1.bf16.msra.mxu0 %v616
    %681 = vmatprep.mubr.bf16.mxu0 %v445
    %682 = vmatmul.mubr.bf16.gmra.mrb[0].mxu0 %v444
    %v683 = vpop.f32.mrb[0].mxu0
    %v684 = vadd.f32 %v503, %v683
    %v685 = vpop.f32.mrb[0].mxu0
    %v686 = vpop.f32.mrb[0].mxu0
    %v687 = vadd.f32 %v503, %v686
    %v688 = vpop.f32.mrb[0].mxu0
    %689 = vmatprep.mubr.bf16.mxu0 %v448
    %690 = vmatmul.mubr.bf16.gmra.mrb[0].mxu0 %v447
    %v691 = vpop.f32.mrb[0].mxu0
    %v692 = vadd.f32 %v503, %v691
    %v693 = vpop.f32.mrb[0].mxu0
    %v694 = vpop.f32.mrb[0].mxu0
    %v695 = vadd.f32 %v503, %v694
    %v696 = vpop.f32.mrb[0].mxu0
    %697 = vdwg.mxu0
    %698 = vmatprep.subr.bf16.mxu0 0
    %699 = vmatpush1.bf16.msra.mxu0 %v617
    %700 = vmatprep.subr.bf16.mxu0 0
    %701 = vmatpush1.bf16.msra.mxu0 %v618
    %702 = vmatprep.subr.bf16.mxu0 0
    %703 = vmatpush1.bf16.msra.mxu0 %v619
    %704 = vmatprep.subr.bf16.mxu0 0
    %705 = vmatpush1.bf16.msra.mxu0 %v620
    %706 = vmatprep.subr.bf16.mxu0 0
    %707 = vmatpush1.bf16.msra.mxu0 %v621
    %708 = vmatprep.subr.bf16.mxu0 0
    %709 = vmatpush1.bf16.msra.mxu0 %v622
    %710 = vmatprep.subr.bf16.mxu0 0
    %711 = vmatpush1.bf16.msra.mxu0 %v623
    %712 = vmatprep.subr.bf16.mxu0 0
    %713 = vmatpush1.bf16.msra.mxu0 %v624
    %714 = vmatprep.subr.bf16.mxu0 0
    %715 = vmatpush1.bf16.msra.mxu0 0
    %716 = vmatprep.subr.bf16.mxu0 0
    %717 = vmatpush1.bf16.msra.mxu0 0
    %718 = vmatprep.subr.bf16.mxu0 0
    %719 = vmatpush1.bf16.msra.mxu0 0
    %720 = vmatprep.subr.bf16.mxu0 0
    %721 = vmatpush1.bf16.msra.mxu0 0
    %722 = vmatprep.subr.bf16.mxu0 0
    %723 = vmatpush1.bf16.msra.mxu0 0
    %724 = vmatprep.subr.bf16.mxu0 0
    %725 = vmatpush1.bf16.msra.mxu0 0
    %726 = vmatprep.subr.bf16.mxu0 0
    %727 = vmatpush1.bf16.msra.mxu0 0
    %728 = vmatprep.subr.bf16.mxu0 0
    %729 = vmatpush1.bf16.msra.mxu0 0
    %730 = vmatprep.mubr.bf16.mxu0 0
    %731 = vmatmul.mubr.bf16.gmra.mrb[0].mxu0 %v446
    %v732 = vpop.f32.mrb[0].mxu0
    %v733 = vadd.f32 %v684, %v732
    %v734 = vpop.f32.mrb[0].mxu0
    %v735 = vpop.f32.mrb[0].mxu0
    %v736 = vadd.f32 %v687, %v735
    %v737 = vpop.f32.mrb[0].mxu0
    %738 = vmatprep.mubr.bf16.mxu0 0
    %739 = vmatmul.mubr.bf16.gmra.mrb[0].mxu0 %v449
    %v740 = vpop.f32.mrb[0].mxu0
    %v741 = vadd.f32 %v692, %v740
    %v742 = vpop.f32.mrb[0].mxu0
    %v743 = vpop.f32.mrb[0].mxu0
    %v744 = vadd.f32 %v695, %v743
    %v745 = vpop.f32.mrb[0].mxu0
    %746 = vdwg.mxu0
    %v747 = vmax.f32 %v733, 0.0
    %v748 = vmax.f32 %v736, 0.0
    %v749 = vmax.f32 %v741, 0.0
    %v750 = vmax.f32 %v744, 0.0
    %v751 = vpack.c.bf16 %v748, %v747
    %v752 = vpack.c.bf16 %v750, %v749
    %v755 = vunpack.c.l.b16 %v751
    %v756 = vunpack.c.h.b16 %v751
    %v757 = vunpack.c.l.b16 %v752
    %v758 = vunpack.c.h.b16 %v752
    %v759 = vpack.c.b16 %v755, %v755
    %v760 = vpack.c.b16 %v756, %v756
    %v761 = vpack.c.b16 %v757, %v757
    %v762 = vpack.c.b16 %v758, %v758
    %767 = vst [vmem:[#allocation2] sm:$0xf] %v759
    %768 = vst [vmem:[#allocation2 + $0x4] sm:$0xf] %v760
    %769 = vst [vmem:[#allocation2 + $0x8] sm:$0xf] %v761
    %770 = vst [vmem:[#allocation2 + $0xc] sm:$0xf] %v762
    // Predicated region
    $region22: #{dila_cnn_forward.1} parent=1 // pred_check
      _
    $region23: #{dila_cnn_forward.1} parent=1 // pred_check_branch
      %772 = sbr.rel (0) target = $region25
    $region24: #{dila_cnn_forward.1} parent=1 // pred_region
      %s774 = ssub.s32 256, 256
      %775 = vsyncadd [#allocation3], %s774
      %s776 = sshll.u32 [#allocation2], 4
      %s777 = int_to_ptr.vmem [resolvable:$true] %s776
      %782 = dma.vmem_to_hbm [thread:$0]  %s777, 256, %s5, [#allocation3], 64, 64, 4
    $region25: #{dila_cnn_forward.1} parent=1 // pred_fallthru
      _
    // Predicated region
    $region26: #{dila_cnn_forward.1} parent=1 // pred_check
      _
    $region27: #{dila_cnn_forward.1} parent=1 // pred_check_branch
      %784 = sbr.rel (0) target = $region29
    $region28: #{dila_cnn_forward.1} parent=1 // pred_region
      %785 = dma.done [#allocation3], 256
    $region29: #{dila_cnn_forward.1} parent=1 // pred_fallthru
      _
    %786 = vsyncpa [#allocation3], 1

</llo_original>
